<compile_context>
chip_gen: v5e
topology: v5e:2x2
jax: 0.10.0
libtpu: 0.0.40
codegen_flags: <defaults>
</compile_context>

<pallas_src>
import jax
import jax.numpy as jnp
from jax.experimental import pallas as pl
from jax.experimental.pallas import tpu as pltpu


# ----------------------------------------------------------------------------
# Precise-RoI-Pool interpolation matrices (analytic, deterministic "weights").
# ----------------------------------------------------------------------------
def _hat_cdf(t):
    """Integral of max(0, 1 - |u|) from -inf to t (CDF of the bilinear hat)."""
    t = jnp.asarray(t, jnp.float32)
    left = 0.5 * (t + 1.0) ** 2
    right = 1.0 - 0.5 * (1.0 - t) ** 2
    return jnp.where(t <= -1.0, 0.0,
           jnp.where(t <= 0.0, left,
           jnp.where(t <= 1.0, right, 1.0)))


def _interp_weights(n_out, roi_extent, n_in):
    """(n_out, n_in): normalized hat-integral of each input sample over each
    output bin along one axis (PrRoIPool 1-D factor)."""
    bin_sz = roi_extent / float(n_out)
    p = jnp.arange(n_out, dtype=jnp.float32)[:, None]
    g = jnp.arange(n_in, dtype=jnp.float32)[None, :]
    lo = p * bin_sz
    hi = (p + 1.0) * bin_sz
    w = _hat_cdf(hi - g) - _hat_cdf(lo - g)
    # PrRoIPool divides the bin integral by win_size = bin_h * bin_w
    # (and outputs 0 when win_size == 0); fold 1/bin_sz into each axis factor.
    if bin_sz > 0.0:
        w = w / bin_sz
    else:
        w = jnp.zeros_like(w)
    return w


def make_prroi_resize_weights(h1, w1, h2, w2):
    # Box from the module: (x1, y1, x2, y2) = (0, 0, h1-1, w1-1); x = W axis,
    # so the H-axis extent is (w1-1) and the W-axis extent is (h1-1).
    # This exactly mirrors the PyTorch module (only a no-op for square inputs).
    wy = _interp_weights(h2, float(w1 - 1), h1)   # (h2, h1): H-axis factor
    wx = _interp_weights(w2, float(h1 - 1), w1)   # (w2, w1): W-axis factor
    return wy, wx


def make_kron_weights_T(h1, w1, h2, w2):
    """(h1*w1, h2*w2) f32 weight: out_flat = x_flat @ WkT."""
    wy, wx = make_prroi_resize_weights(h1, w1, h2, w2)
    # Wk[p*w2 + q, h*w1 + w] = Wy[p, h] * Wx[q, w]
    wk = jnp.einsum('ph,qw->pqhw', wy, wx).reshape(h2 * w2, h1 * w1)
    return wk.T.astype(jnp.float32)


# ----------------------------------------------------------------------------
# Pallas kernel: one lane-dense matmul per row tile.
# ----------------------------------------------------------------------------
def _resize_matmul_kernel(x_ref, w_ref, o_ref):
    # x_ref: (tm, H1*W1) in the input dtype (no explicit f32 upcast).
    # w_ref: (H1*W1, H2*W2) f32, grid-invariant (stays resident in VMEM).
    o_ref[...] = jnp.dot(
        x_ref[...], w_ref[...],
        preferred_element_type=jnp.float32,
    ).astype(o_ref.dtype)


def resize_module_forward(x, h2, w2):
    """PrRoIPool-based resize of NCHW `x` to (h2, w2), then squeeze."""
    n, c, h1, w1 = x.shape
    k = h1 * w1
    n_out = h2 * w2
    m = n * c

    wkT = make_kron_weights_T(h1, w1, h2, w2)     # (k, n_out) f32

    # Kron weight must fit comfortably in VMEM (f32, with headroom for the
    # double-buffered activation/output tiles even on v7x's 64 MiB VMEM).
    # TODO(synk): add a separable two-matmul fallback path for very large
    # images where kron(Wy, Wx) would not fit in VMEM.
    assert wkT.size * 4 <= 16 * 1024 * 1024, "W_kron too large for VMEM path"

    # Lane-dense flattening: last dim is H1*W1 (input) / H2*W2 (output).
    x_flat = x.reshape(m, k)

    # Row tiling over N*C: single full block when small, 256-row MXU tiles
    # when large (also fine on v5e's 128-wide MXU: 256 is a multiple of 128).
    if m <= 256:
        tm, m_pad = m, m
    else:
        tm = 256
        m_pad = ((m + tm - 1) // tm) * tm
        if m_pad != m:
            x_flat = jnp.pad(x_flat, ((0, m_pad - m), (0, 0)))

    grid = (m_pad // tm,)

    itemsize = jnp.dtype(x.dtype).itemsize
    cost = pl.CostEstimate(
        flops=int(2 * m_pad * k * n_out),
        transcendentals=0,
        bytes_accessed=int(m_pad * k * itemsize         # x_flat
                           + k * n_out * 4              # weights (f32)
                           + m_pad * n_out * itemsize), # output
    )

    # VMEM budget: double-buffered x/out tiles + resident weights + headroom.
    vmem_needed = 2 * (tm * k * itemsize + tm * n_out * itemsize) \
        + k * n_out * 4 + (1 << 20)
    vmem_limit = min(max(vmem_needed, 32 * 1024 * 1024), 48 * 1024 * 1024)

    out_flat = pl.pallas_call(
        _resize_matmul_kernel,
        out_shape=jax.ShapeDtypeStruct((m_pad, n_out), x.dtype),
        grid_spec=pltpu.PrefetchScalarGridSpec(
            num_scalar_prefetch=0,
            grid=grid,
            in_specs=[
                pl.BlockSpec((tm, k), lambda i: (i, 0)),
                pl.BlockSpec((k, n_out), lambda i: (0, 0)),   # grid-invariant
            ],
            out_specs=pl.BlockSpec((tm, n_out), lambda i: (i, 0)),
        ),
        compiler_params=pltpu.CompilerParams(
            dimension_semantics=("parallel",),
            vmem_limit_bytes=int(vmem_limit),
        ),
        cost_estimate=cost,
    )(x_flat, wkT)

    out = out_flat[:m].reshape(n, c, h2, w2)
    return jnp.squeeze(out)   # mirrors the PyTorch `.squeeze()`


if __name__ == "__main__":
    # Small shapes consistent with the module: resize (16,16) -> (8,8).
    N, C, H1, W1 = 2, 4, 16, 16
    H2, W2 = 8, 8

    key = jax.random.PRNGKey(0)
    x = jax.random.normal(key, (N, C, H1, W1), dtype=jnp.float32)

    out = resize_module_forward(x, H2, W2)
    out = jax.block_until_ready(out)
    assert out.shape == (N, C, H2, W2), out.shape

    # Pure-JAX reference of the same separable PrRoIPool math.
    wy, wx = make_prroi_resize_weights(H1, W1, H2, W2)
    ref = jnp.einsum('nchw,ph,qw->ncpq', x, wy, wx)
    ref = jnp.squeeze(ref)
    assert jnp.allclose(out, ref, atol=1e-4, rtol=1e-4), \
        float(jnp.max(jnp.abs(out - ref)))

    # Constant input must resize to the same constant (partition-of-unity).
    const = jnp.full((N, C, H1, W1), 3.5, dtype=jnp.float32)
    out_c = jax.block_until_ready(resize_module_forward(const, H2, W2))
    assert jnp.allclose(out_c, 3.5, atol=1e-4)

    print("KERNEL_OK")
</pallas_src>

<mosaic_0001>
module attributes {stable_mosaic.version = 11 : i64} {
  func.func @_resize_matmul_kernel(%arg0: i32, %arg1: memref<8x256xf32, #tpu.memory_space<vmem>>, %arg2: memref<256x64xf32, #tpu.memory_space<vmem>>, %arg3: memref<8x64xf32, #tpu.memory_space<vmem>>) attributes {dimension_semantics = [#tpu.dimension_semantics<parallel>], iteration_bounds = array<i64: 1>, scalar_prefetch = 0 : i64, scratch_operands = 0 : i64, tpu.core_type = #tpu.core_type<tc>, window_params = [{transform_indices = @transform_0, window_bounds = array<i64: 8, 256>}, {pipeline_mode = #tpu.pipeline_mode<synchronous>, transform_indices = @transform_1, window_bounds = array<i64: 256, 64>}, {transform_indices = @transform_2, window_bounds = array<i64: 8, 64>}]} {
    %c0 = arith.constant 0 : index
    %c0_0 = arith.constant 0 : index
    %0 = vector.load %arg1[%c0, %c0_0] : memref<8x256xf32, #tpu.memory_space<vmem>>, vector<8x256xf32>
    %c0_1 = arith.constant 0 : index
    %c0_2 = arith.constant 0 : index
    %1 = vector.load %arg2[%c0_1, %c0_2] : memref<256x64xf32, #tpu.memory_space<vmem>>, vector<256x64xf32>
    %cst = arith.constant dense<0.000000e+00> : vector<8x64xf32>
    %2 = tpu.matmul %0, %1, %cst {dimension_numbers = #tpu.dot_dimension_numbers<[1], [0], [0], [1], [0, 0, 1, 1], [], []>} : vector<8x256xf32>, vector<256x64xf32>, vector<8x64xf32> -> vector<8x64xf32>
    %c0_3 = arith.constant 0 : index
    %c0_4 = arith.constant 0 : index
    %3 = vector.load %arg3[%c0_3, %c0_4] : memref<8x64xf32, #tpu.memory_space<vmem>>, vector<8x64xf32>
    tpu.vector_store %arg3[%c0_3, %c0_4], %2 {strides = array<i32>} : memref<8x64xf32, #tpu.memory_space<vmem>>, vector<8x64xf32>,
    return
  }
  func.func @transform_0(%arg0: i32) -> (i32, i32) {
    %c0_i32 = arith.constant 0 : i32
    %c0_i32_0 = arith.constant 0 : i32
    return %arg0, %c0_i32 : i32, i32
  }
  func.func @transform_1(%arg0: i32) -> (i32, i32) {
    %c0_i32 = arith.constant 0 : i32
    %c0_i32_0 = arith.constant 0 : i32
    %c0_i32_1 = arith.constant 0 : i32
    return %c0_i32, %c0_i32_0 : i32, i32
  }
  func.func @transform_2(%arg0: i32) -> (i32, i32) {
    %c0_i32 = arith.constant 0 : i32
    %c0_i32_0 = arith.constant 0 : i32
    return %arg0, %c0_i32 : i32, i32
  }
}

</mosaic_0001>

<llo_original>
// kernel: tpu_custom_call.1
$region0: #{tpu_custom_call.1}
  #allocation0 [shape = 'u32[]', space=smem, size = 0x4, offset = 0x4, fixed_abs, tag = 'smem constant byte address 0x4 - core index']
  #allocation1 [shape = 'u32[72,128]{1,0:T(1,128)}', space=vmem, size = 0x9000, scoped, tag = 'internal scratch']
  %s0 = inlined_call_operand.vmem [shape: f32[8,256], index: 0, kind: input, shape index: {}]
  %s1 = inlined_call_operand.vmem [shape: f32[256,64], index: 1, kind: input, shape index: {}]
  %s2 = inlined_call_operand.hbm [shape: f32[8,64], index: 2, kind: output, shape index: {}]
  %s3 = sld [smem:[#allocation0]]
  $region18: #{tpu_custom_call.1} parent=0
    _
  %s5 = ssub.s32 1, %s3
  %s6 = scalar_select 0, %s5, %s3
  $region1: #{tpu_custom_call.1} parent=0
    #allocation2 [shape = 'u8[4096]{0}', space=vmem, size = 0x1000, scoped, tag = 'output window, operand 0, single buffered']
    #allocation3 [shape = 's32[1]{0}', space=sflag, size = 0x4, scoped, tag = 'scoped memory for tpu_custom_call.1']
    %7 = vsyncpa [#allocation3], 0
    // Predicated region
    $region2: #{tpu_custom_call.1} parent=1 // pred_check
      _
    $region3: #{tpu_custom_call.1} parent=1 // pred_check_branch
      %9 = sbr.rel (0) target = $region5
    $region4: #{tpu_custom_call.1} parent=1 // pred_region
      _
    $region5: #{tpu_custom_call.1} parent=1 // pred_fallthru
      _
    // Predicated region
    $region6: #{tpu_custom_call.1} parent=1 // pred_check
      _
    $region7: #{tpu_custom_call.1} parent=1 // pred_check_branch
      %11 = sbr.rel (0) target = $region9
    $region8: #{tpu_custom_call.1} parent=1 // pred_region
      _
    $region9: #{tpu_custom_call.1} parent=1 // pred_fallthru
      _
    %v12 = vld [vmem:[%s0] sm:$0xff]
    %v13 = vld [vmem:[%s0 + $0x8] sm:$0xff]
    %v14 = vld [vmem:[%s1] sm:$0xff]
    %v15 = vld [vmem:[%s1 + $0x8] sm:$0xff]
    %v16 = vld [vmem:[%s1 + $0x10] sm:$0xff]
    %v17 = vld [vmem:[%s1 + $0x18] sm:$0xff]
    %v18 = vld [vmem:[%s1 + $0x20] sm:$0xff]
    %v19 = vld [vmem:[%s1 + $0x28] sm:$0xff]
    %v20 = vld [vmem:[%s1 + $0x30] sm:$0xff]
    %v21 = vld [vmem:[%s1 + $0x38] sm:$0xff]
    %v22 = vld [vmem:[%s1 + $0x40] sm:$0xff]
    %v23 = vld [vmem:[%s1 + $0x48] sm:$0xff]
    %v24 = vld [vmem:[%s1 + $0x50] sm:$0xff]
    %v25 = vld [vmem:[%s1 + $0x58] sm:$0xff]
    %v26 = vld [vmem:[%s1 + $0x60] sm:$0xff]
    %v27 = vld [vmem:[%s1 + $0x68] sm:$0xff]
    %v28 = vld [vmem:[%s1 + $0x70] sm:$0xff]
    %v29 = vld [vmem:[%s1 + $0x78] sm:$0xff]
    %v30 = vld [vmem:[%s1 + $0x80] sm:$0xff]
    %v31 = vld [vmem:[%s1 + $0x88] sm:$0xff]
    %v32 = vld [vmem:[%s1 + $0x90] sm:$0xff]
    %v33 = vld [vmem:[%s1 + $0x98] sm:$0xff]
    %v34 = vld [vmem:[%s1 + $0xa0] sm:$0xff]
    %v35 = vld [vmem:[%s1 + $0xa8] sm:$0xff]
    %v36 = vld [vmem:[%s1 + $0xb0] sm:$0xff]
    %v37 = vld [vmem:[%s1 + $0xb8] sm:$0xff]
    %v38 = vld [vmem:[%s1 + $0xc0] sm:$0xff]
    %v39 = vld [vmem:[%s1 + $0xc8] sm:$0xff]
    %v40 = vld [vmem:[%s1 + $0xd0] sm:$0xff]
    %v41 = vld [vmem:[%s1 + $0xd8] sm:$0xff]
    %v42 = vld [vmem:[%s1 + $0xe0] sm:$0xff]
    %v43 = vld [vmem:[%s1 + $0xe8] sm:$0xff]
    %v44 = vld [vmem:[%s1 + $0xf0] sm:$0xff]
    %v45 = vld [vmem:[%s1 + $0xf8] sm:$0xff]
    %46 = vmatpush.msra.mxu0 %v29
    %47 = vmatpush.msra.mxu0 %v28
    %48 = vmatpush.msra.mxu0 %v27
    %49 = vmatpush.msra.mxu0 %v26
    %50 = vmatpush.msra.mxu0 %v25
    %51 = vmatpush.msra.mxu0 %v24
    %52 = vmatpush.msra.mxu0 %v23
    %53 = vmatpush.msra.mxu0 %v22
    %54 = vmatpush.msra.mxu0 %v21
    %55 = vmatpush.msra.mxu0 %v20
    %56 = vmatpush.msra.mxu0 %v19
    %57 = vmatpush.msra.mxu0 %v18
    %58 = vmatpush.msra.mxu0 %v17
    %59 = vmatpush.msra.mxu0 %v16
    %60 = vmatpush.msra.mxu0 %v15
    %61 = vmatpush.msra.mxu0 %v14
    %62 = vmatmul.f32.gmra.mxu0 %v12
    %v63 = vpop.f32.mrf.mxu0
    %v64 = vadd.f32 0.0, %v63
    %65 = vdwg.mxu0
    %66 = vmatpush.msra.mxu0 %v45
    %67 = vmatpush.msra.mxu0 %v44
    %68 = vmatpush.msra.mxu0 %v43
    %69 = vmatpush.msra.mxu0 %v42
    %70 = vmatpush.msra.mxu0 %v41
    %71 = vmatpush.msra.mxu0 %v40
    %72 = vmatpush.msra.mxu0 %v39
    %73 = vmatpush.msra.mxu0 %v38
    %74 = vmatpush.msra.mxu0 %v37
    %75 = vmatpush.msra.mxu0 %v36
    %76 = vmatpush.msra.mxu0 %v35
    %77 = vmatpush.msra.mxu0 %v34
    %78 = vmatpush.msra.mxu0 %v33
    %79 = vmatpush.msra.mxu0 %v32
    %80 = vmatpush.msra.mxu0 %v31
    %81 = vmatpush.msra.mxu0 %v30
    %82 = vmatmul.f32.gmra.mxu0 %v13
    %v83 = vpop.f32.mrf.mxu0
    %v84 = vadd.f32 %v64, %v83
    %85 = vdwg.mxu0
    %vm86 = vcmask 523264
    %87 = vst.msk [vmem:[#allocation2] sm:$0xff] %vm86, %v84
    // Predicated region
    $region10: #{tpu_custom_call.1} parent=1 // pred_check
      _
    $region11: #{tpu_custom_call.1} parent=1 // pred_check_branch
      %89 = sbr.rel (0) target = $region13
    $region12: #{tpu_custom_call.1} parent=1 // pred_region
      %91 = vsyncadd [#allocation3], 0
      %s93 = sshll.u32 [#allocation2], 4
      %s94 = int_to_ptr.vmem [resolvable:$true] %s93
      %s95 = sshll.u32 %s2, 4
      %s96 = int_to_ptr.hbm [resolvable:$true] %s95
      %98 = dma.vmem_to_hbm [thread:$0]  %s94, 128, %s96, [#allocation3]
    $region13: #{tpu_custom_call.1} parent=1 // pred_fallthru
      _
    // Predicated region
    $region14: #{tpu_custom_call.1} parent=1 // pred_check
      _
    $region15: #{tpu_custom_call.1} parent=1 // pred_check_branch
      %100 = sbr.rel (0) target = $region17
    $region16: #{tpu_custom_call.1} parent=1 // pred_region
      %102 = dma.done [#allocation3], 128
    $region17: #{tpu_custom_call.1} parent=1 // pred_fallthru
      _
    %103 = vsyncpa [#allocation3], 1

</llo_original>
